<compile_context>
chip_gen: v7x
topology: tpu7x:2x2x1
jax: 0.10.0
libtpu: 0.0.40
codegen_flags: <defaults>
</compile_context>

<pallas_src>
import jax
import jax.numpy as jnp
from jax.experimental import pallas as pl
from jax.experimental.pallas import tpu as pltpu

_MIB = 1024 * 1024
_ACT_TILE_TARGET_BYTES = 4 * _MIB   # 2-4 MiB activation tiles ~ 85%+ of HBM roofline


def _round_down(x, m):
    return max(m, (x // m) * m)


def _round_up(x, m):
    return ((x + m - 1) // m) * m


def _vmem_budget():
    """Generation-aware VMEM budgeting -> (vmem_limit_bytes, tile_budget_bytes)."""
    try:
        capacity = pltpu.get_tpu_info().vmem_capacity_bytes
    except Exception:
        capacity = 128 * _MIB
    if capacity <= 64 * _MIB:        # v7x: 64 MiB physical VMEM per TensorCore
        limit = 32 * _MIB
    else:                            # v5e / v6e: 128 MiB physical VMEM
        limit = 64 * _MIB
    return limit, limit - 4 * _MIB   # keep headroom for Mosaic internal scratch


def _plan_tiles(M, H, N, x_itemsize, w_itemsize, out_itemsize, tile_n_override=None):
    """Pick (tile_m, tile_n): byte-targeted M tiles, N tiled only when the
    resident weight would not fit the VMEM budget."""
    _, budget = _vmem_budget()

    # Sub-32-bit dtypes pack rows along sublanes -> coarser row granularity.
    row_mult = max(8, (4 // max(1, x_itemsize)) * 8)

    # ---- out_dim tiling decision (weight uses its OWN itemsize) ----
    if tile_n_override is not None:
        tile_n = int(tile_n_override)
    else:
        resident_w_bytes = 2 * (H * N * w_itemsize + N * out_itemsize)  # 2x buffering
        if resident_w_bytes <= budget // 2:
            tile_n = N                                   # weight stays resident
        else:
            per_col = 2 * (H * w_itemsize + out_itemsize)
            max_tile_n = (budget // 2) // per_col
            tile_n = min(_round_down(max_tile_n, 128), _round_up(N, 128))
            tile_n = max(tile_n, 128)                    # lane-aligned weight/out tiles

    # ---- M tiling: byte target, VMEM fit, and grid_m >= ~4 for v7x megacore ----
    w_tile_bytes = 2 * (H * tile_n * w_itemsize + tile_n * out_itemsize)
    per_row = 2 * (H * x_itemsize + tile_n * out_itemsize)   # double-buffered x + out
    avail = max(budget - w_tile_bytes, per_row * row_mult)

    tile_m = max(row_mult, _ACT_TILE_TARGET_BYTES // (H * x_itemsize))
    tile_m = min(tile_m, avail // per_row)
    tile_m = min(tile_m, _round_up(pl.cdiv(M, 4), row_mult))  # keep >= ~4 grid steps
    if tile_m >= M:
        tile_m = M                                            # full dim is always legal
    else:
        tile_m = _round_down(tile_m, row_mult)
    return int(tile_m), int(tile_n)


def _linear_kernel(x_ref, w_ref, b_ref, o_ref):
    # x_ref: (tile_m, H)   w_ref: (H, tile_n)   b_ref: (1, tile_n)
    # o_ref: (tile_m, tile_n)
    acc = jnp.dot(x_ref[...], w_ref[...], preferred_element_type=jnp.float32)
    o_ref[...] = (acc + b_ref[...].astype(jnp.float32)).astype(o_ref.dtype)


def enm_no_adaptor_classifier(seq_embedding, enm_input, weight, bias,
                              *, _tile_n_override=None):
    """seq_embedding: (B, S, H); enm_input is ignored (matches the PyTorch forward).
    weight: (out_dim, H) as in nn.Linear; bias: (out_dim,)."""
    del enm_input  # unused, exactly like the reference module

    B, S, H = seq_embedding.shape
    out_dim, H_w = weight.shape
    assert H_w == H, "weight must be (out_dim, seq_embedding_dim)"

    x_dtype = seq_embedding.dtype
    x_isz = jnp.dtype(x_dtype).itemsize
    w_isz = jnp.dtype(weight.dtype).itemsize
    M, N = B * S, out_dim

    x2d = seq_embedding.reshape(M, H)
    w_t = jnp.transpose(weight)          # one-time (H, N) transpose -> clean MXU RHS
    b2d = bias.reshape(1, N)

    tile_m, tile_n = _plan_tiles(M, H, N, x_isz, w_isz, x_isz,
                                 tile_n_override=_tile_n_override)
    grid_m = pl.cdiv(M, tile_m)
    grid_n = pl.cdiv(N, tile_n)

    vmem_limit, _ = _vmem_budget()

    cost = pl.CostEstimate(
        flops=2 * M * H * N,
        bytes_accessed=(M * H * x_isz + H * N * w_isz
                        + N * jnp.dtype(bias.dtype).itemsize + M * N * x_isz),
        transcendentals=0)

    out2d = pl.pallas_call(
        _linear_kernel,
        out_shape=jax.ShapeDtypeStruct((M, N), x_dtype),
        grid_spec=pltpu.PrefetchScalarGridSpec(
            num_scalar_prefetch=0,
            grid=(grid_m, grid_n),
            in_specs=[
                pl.BlockSpec((tile_m, H), lambda i, j: (i, 0)),   # streamed activations
                pl.BlockSpec((H, tile_n), lambda i, j: (0, j)),   # resident / N-tiled weight
                pl.BlockSpec((1, tile_n), lambda i, j: (0, j)),   # bias
            ],
            out_specs=pl.BlockSpec((tile_m, tile_n), lambda i, j: (i, j)),
        ),
        compiler_params=pltpu.CompilerParams(
            dimension_semantics=("parallel", "parallel"),  # both axes independent
            vmem_limit_bytes=vmem_limit,
        ),
        cost_estimate=cost,
    )(x2d, w_t, b2d)

    return out2d.reshape(B, S, out_dim)


if __name__ == "__main__":
    key = jax.random.PRNGKey(0)
    k_x, k_enm, k_w, k_b, k_x2, k_w3, k_b3, k_x3 = jax.random.split(key, 8)

    # --- 1) Small shapes consistent with the module's forward -------------
    B, S, H, OUT = 2, 8, 32, 16

    seq_embedding = jax.random.normal(k_x, (B, S, H), dtype=jnp.float32)
    enm_input = jax.random.normal(k_enm, (B, S, 3), dtype=jnp.float32)  # ignored

    bound = 1.0 / float(jnp.sqrt(jnp.float32(H)))
    weight = jax.random.uniform(k_w, (OUT, H), minval=-bound, maxval=bound,
                                dtype=jnp.float32)
    bias = jax.random.uniform(k_b, (OUT,), minval=-bound, maxval=bound,
                              dtype=jnp.float32)

    logits = enm_no_adaptor_classifier(seq_embedding, enm_input, weight, bias)
    jax.block_until_ready(logits)
    ref = seq_embedding @ weight.T + bias
    assert logits.shape == (B, S, OUT)
    assert jnp.allclose(logits, ref, atol=1e-5, rtol=1e-5)

    # --- 2) Multi-tile M path (grid_m > 1, megacore-style split) ----------
    B2, S2 = 2, 1024
    x2 = jax.random.normal(k_x2, (B2, S2, H), dtype=jnp.float32)
    logits2 = enm_no_adaptor_classifier(x2, None, weight, bias)
    jax.block_until_ready(logits2)
    ref2 = x2 @ weight.T + bias
    assert logits2.shape == (B2, S2, OUT)
    assert jnp.allclose(logits2, ref2, atol=1e-5, rtol=1e-5)

    # --- 3) out_dim-tiled path (grid_n > 1), forced via the test override --
    B3, S3, OUT3 = 2, 64, 256
    x3 = jax.random.normal(k_x3, (B3, S3, H), dtype=jnp.float32)
    weight3 = jax.random.uniform(k_w3, (OUT3, H), minval=-bound, maxval=bound,
                                 dtype=jnp.float32)
    bias3 = jax.random.uniform(k_b3, (OUT3,), minval=-bound, maxval=bound,
                               dtype=jnp.float32)
    logits3 = enm_no_adaptor_classifier(x3, None, weight3, bias3,
                                        _tile_n_override=128)
    jax.block_until_ready(logits3)
    ref3 = x3 @ weight3.T + bias3
    assert logits3.shape == (B3, S3, OUT3)
    assert jnp.allclose(logits3, ref3, atol=1e-5, rtol=1e-5)

    print("KERNEL_OK")
</pallas_src>

<mosaic_0001>
module attributes {stable_mosaic.version = 11 : i64} {
  func.func @_linear_kernel(%arg0: i32, %arg1: i32, %arg2: memref<8x32xf32, #tpu.memory_space<vmem>>, %arg3: memref<32x16xf32, #tpu.memory_space<vmem>>, %arg4: memref<1x16xf32, #tpu.memory_space<vmem>>, %arg5: memref<8x16xf32, #tpu.memory_space<vmem>>) attributes {dimension_semantics = [#tpu.dimension_semantics<parallel>, #tpu.dimension_semantics<parallel>], iteration_bounds = array<i64: 2, 1>, scalar_prefetch = 0 : i64, scratch_operands = 0 : i64, tpu.core_type = #tpu.core_type<tc>, window_params = [{transform_indices = @transform_0, window_bounds = array<i64: 8, 32>}, {transform_indices = @transform_1, window_bounds = array<i64: 32, 16>}, {transform_indices = @transform_2, window_bounds = array<i64: 1, 16>}, {transform_indices = @transform_3, window_bounds = array<i64: 8, 16>}]} {
    %c0 = arith.constant 0 : index
    %c0_0 = arith.constant 0 : index
    %0 = vector.load %arg2[%c0, %c0_0] : memref<8x32xf32, #tpu.memory_space<vmem>>, vector<8x32xf32>
    %c0_1 = arith.constant 0 : index
    %c0_2 = arith.constant 0 : index
    %1 = vector.load %arg3[%c0_1, %c0_2] : memref<32x16xf32, #tpu.memory_space<vmem>>, vector<32x16xf32>
    %cst = arith.constant dense<0.000000e+00> : vector<8x16xf32>
    %2 = tpu.matmul %0, %1, %cst {dimension_numbers = #tpu.dot_dimension_numbers<[1], [0], [0], [1], [0, 0, 1, 1], [], []>} : vector<8x32xf32>, vector<32x16xf32>, vector<8x16xf32> -> vector<8x16xf32>
    %c0_3 = arith.constant 0 : index
    %c0_4 = arith.constant 0 : index
    %3 = vector.load %arg4[%c0_3, %c0_4] : memref<1x16xf32, #tpu.memory_space<vmem>>, vector<1x16xf32>
    %4 = vector.broadcast %3 : vector<1x16xf32> to vector<8x16xf32>
    %5 = arith.addf %2, %4 : vector<8x16xf32>
    %c0_5 = arith.constant 0 : index
    %c0_6 = arith.constant 0 : index
    %6 = vector.load %arg5[%c0_5, %c0_6] : memref<8x16xf32, #tpu.memory_space<vmem>>, vector<8x16xf32>
    tpu.vector_store %arg5[%c0_5, %c0_6], %5 {strides = array<i32>} : memref<8x16xf32, #tpu.memory_space<vmem>>, vector<8x16xf32>,
    return
  }
  func.func @transform_0(%arg0: i32, %arg1: i32) -> (i32, i32) {
    %c0_i32 = arith.constant 0 : i32
    %c0_i32_0 = arith.constant 0 : i32
    return %arg0, %c0_i32 : i32, i32
  }
  func.func @transform_1(%arg0: i32, %arg1: i32) -> (i32, i32) {
    %c0_i32 = arith.constant 0 : i32
    %c0_i32_0 = arith.constant 0 : i32
    return %c0_i32, %arg1 : i32, i32
  }
  func.func @transform_2(%arg0: i32, %arg1: i32) -> (i32, i32) {
    %c0_i32 = arith.constant 0 : i32
    %c0_i32_0 = arith.constant 0 : i32
    return %c0_i32, %arg1 : i32, i32
  }
  func.func @transform_3(%arg0: i32, %arg1: i32) -> (i32, i32) {
    %c0_i32 = arith.constant 0 : i32
    return %arg0, %arg1 : i32, i32
  }
}

</mosaic_0001>

<llo_original>
// kernel: tpu_custom_call.1
$region0: #{tpu_custom_call.1}
  #allocation0 [shape = 'u32[]', space=smem, size = 0x4, offset = 0x4, fixed_abs, tag = 'smem constant byte address 0x4 - core index']
  #allocation1 [shape = 'u32[144,128]{1,0:T(1,128)}', space=vmem, size = 0x12000, scoped, tag = 'internal scratch']
  %s0 = inlined_call_operand.hbm [shape: f32[16,32], index: 0, kind: input, shape index: {}]
  %s1 = inlined_call_operand.hbm [shape: f32[32,16], index: 1, kind: input, shape index: {}]
  %s2 = inlined_call_operand.hbm [shape: f32[1,16], index: 2, kind: input, shape index: {}]
  %s3 = inlined_call_operand.hbm [shape: f32[16,16], index: 3, kind: output, shape index: {}]
  %s4 = sld [smem:[#allocation0]]
  $region57: #{tpu_custom_call.1} parent=0
    _
  %s6 = ssub.s32 1, %s4
  %s7 = scalar_select 0, %s6, %s4
  $region1: #{tpu_custom_call.1} parent=0
    #allocation2 [shape = 'u8[8192]{0}', space=vmem, size = 0x2000, scoped, tag = 'input window, operand 0']
    #allocation3 [shape = 's32[2]{0}', space=sflag, size = 0x8, scoped, tag = 'scoped memory for tpu_custom_call.1']
    #allocation4 [shape = 's32[2]{0}', space=sflag, size = 0x8, scoped, tag = 'scoped memory for tpu_custom_call.1']
    #allocation5 [shape = 'u8[16384]{0}', space=vmem, size = 0x4000, scoped, tag = 'input window, operand 1, single buffered']
    #allocation6 [shape = 's32[1]{0}', space=sflag, size = 0x4, scoped, tag = 'scoped memory for tpu_custom_call.1']
    #allocation7 [shape = 'u8[512]{0}', space=vmem, size = 0x400, scoped, tag = 'input window, operand 2, single buffered']
    #allocation8 [shape = 'u8[8192]{0}', space=vmem, size = 0x2000, scoped, tag = 'output window, operand 0']
    %8 = vsyncpa [#allocation3], 0
    %s9 = scalar_lea.sflag [#allocation3], 1
    %10 = vsyncpa %s9, 0
    %11 = vsyncpa [#allocation6], 0
    %12 = vsyncpa [#allocation4], 0
    %s13 = scalar_lea.sflag [#allocation4], 1
    %14 = vsyncpa %s13, 0
    loop: start=0, step=1, limit=4
    $region2: #{tpu_custom_call.1} parent=1 // loop_pre_header
      _
    $region3: #{tpu_custom_call.1} parent=1 // loop_header
      %s16 = sphi 0, %s20
      %p17 = scmp.ge.s32.totalorder %s16, 4
      %s23 = sphi 0, %s35
      %s24 = sphi 0, %s31
      %s25 = sphi 0, %s23
      %s26 = sphi 0, %s24
      %s27 = sphi 0, %s25
      %s28 = sphi 0, %s26
      %s38 = sphi 0, %s40
      %s41 = sphi 0, %s38
      %s42 = sphi 0, %s41
      %s58 = sphi 0, %s42
      %s64 = sphi 0, %s66
      %s67 = sphi 0, %s64
      %s68 = sphi 0, %s67
      %s84 = sphi 0, %s68
      %s90 = sphi 0, %s92
      %s93 = sphi 0, %s90
      %s94 = sphi 0, %s93
      %s110 = sphi 0, %s94
      %s118 = sphi 0, %s120
      %s121 = sphi 0, %s118
      %s122 = sphi 0, %s121
      %s138 = sphi 0, %s122
    $region4: #{tpu_custom_call.1} parent=1 // loop_header_branch
      %19 = sbr.rel (%p17) target = $region8
    $region5: #{tpu_custom_call.1} parent=1 // loop_body
      %s21 = ssub.s32 %s16, 1
      %s22 = ssub.s32 %s16, 2
      %s29 = sadd.s32 1, %s24
      %p30 = scmp.ge.s32.totalorder %s29, 1
      %s31 = scalar_select %p30, 0, %s29
      %s32 = sadd.s32 1, %s23
      %s33 = scalar_select %p30, %s32, %s23
      %p34 = scmp.ge.s32.totalorder %s33, 2
      %s35 = scalar_select %p34, 0, %s33
      %s36 = ssub.s32 %s23, %s35
      %p37 = scmp.eq.s32.totalorder %s36, 0
      %s39 = sadd.s32 %s38, 1
      %s40 = scalar_select %p37, %s38, %s39
      %p43 = pneg %p37
      %p44 = scmp.eq.s32.totalorder %s16, 1
      %p45 = por %p43, %p44
      %p46 = scmp.ne.s32.totalorder %s38, %s41
      %p47 = scmp.eq.s32.totalorder %s16, 0
      %p48 = por %p46, %p47
      %p49 = scmp.ne.s32.totalorder %s38, %s41
      %p50 = scmp.eq.s32.totalorder %s21, 1
      %p51 = por %p49, %p50
      %p52 = scmp.ne.s32.totalorder %s41, %s42
      %p53 = scmp.eq.s32.totalorder %s21, 0
      %p54 = por %p52, %p53
      %p55 = scmp.ne.s32.totalorder %s41, %s42
      %p56 = scmp.eq.s32.totalorder %s22, 1
      %p57 = por %p55, %p56
      %p59 = scmp.ne.s32.totalorder %s42, %s58
      %p60 = scmp.eq.s32.totalorder %s22, 0
      %p61 = por %p59, %p60
      %s62 = ssub.s32 %s24, %s31
      %p63 = scmp.eq.s32.totalorder %s62, 0
      %s65 = sadd.s32 %s64, 1
      %s66 = scalar_select %p63, %s64, %s65
      %p69 = pneg %p63
      %p70 = scmp.eq.s32.totalorder %s16, 1
      %p71 = por %p69, %p70
      %p72 = scmp.ne.s32.totalorder %s64, %s67
      %p73 = scmp.eq.s32.totalorder %s16, 0
      %p74 = por %p72, %p73
      %p75 = scmp.ne.s32.totalorder %s64, %s67
      %p76 = scmp.eq.s32.totalorder %s21, 1
      %p77 = por %p75, %p76
      %p78 = scmp.ne.s32.totalorder %s67, %s68
      %p79 = scmp.eq.s32.totalorder %s21, 0
      %p80 = por %p78, %p79
      %p81 = scmp.ne.s32.totalorder %s67, %s68
      %p82 = scmp.eq.s32.totalorder %s22, 1
      %p83 = por %p81, %p82
      %p85 = scmp.ne.s32.totalorder %s68, %s84
      %p86 = scmp.eq.s32.totalorder %s22, 0
      %p87 = por %p85, %p86
      %s88 = ssub.s32 %s24, %s31
      %p89 = scmp.eq.s32.totalorder %s88, 0
      %s91 = sadd.s32 %s90, 1
      %s92 = scalar_select %p89, %s90, %s91
      %p95 = pneg %p89
      %p96 = scmp.eq.s32.totalorder %s16, 1
      %p97 = por %p95, %p96
      %p98 = scmp.ne.s32.totalorder %s90, %s93
      %p99 = scmp.eq.s32.totalorder %s16, 0
      %p100 = por %p98, %p99
      %p101 = scmp.ne.s32.totalorder %s90, %s93
      %p102 = scmp.eq.s32.totalorder %s21, 1
      %p103 = por %p101, %p102
      %p104 = scmp.ne.s32.totalorder %s93, %s94
      %p105 = scmp.eq.s32.totalorder %s21, 0
      %p106 = por %p104, %p105
      %p107 = scmp.ne.s32.totalorder %s93, %s94
      %p108 = scmp.eq.s32.totalorder %s22, 1
      %p109 = por %p107, %p108
      %p111 = scmp.ne.s32.totalorder %s94, %s110
      %p112 = scmp.eq.s32.totalorder %s22, 0
      %p113 = por %p111, %p112
      %s114 = ssub.s32 %s23, %s35
      %s115 = ssub.s32 %s24, %s31
      %s116 = sor.u32 %s114, %s115
      %p117 = scmp.eq.s32.totalorder %s116, 0
      %s119 = sadd.s32 %s118, 1
      %s120 = scalar_select %p117, %s118, %s119
      %p123 = pneg %p117
      %p124 = scmp.eq.s32.totalorder %s16, 1
      %p125 = por %p123, %p124
      %p126 = scmp.ne.s32.totalorder %s118, %s121
      %p127 = scmp.eq.s32.totalorder %s16, 0
      %p128 = por %p126, %p127
      %p129 = scmp.ne.s32.totalorder %s118, %s121
      %p130 = scmp.eq.s32.totalorder %s21, 1
      %p131 = por %p129, %p130
      %p132 = scmp.ne.s32.totalorder %s121, %s122
      %p133 = scmp.eq.s32.totalorder %s21, 0
      %p134 = por %p132, %p133
      %p135 = scmp.ne.s32.totalorder %s121, %s122
      %p136 = scmp.eq.s32.totalorder %s22, 1
      %p137 = por %p135, %p136
      %p139 = scmp.ne.s32.totalorder %s122, %s138
      %p140 = scmp.eq.s32.totalorder %s22, 0
      %p141 = por %p139, %p140
      %p142 = scmp.le.s32.totalorder 1, %s16
      %p143 = scmp.lt.s32.totalorder %s16, 3
      %p144 = pnand %p142, %p143
      %p145 = pneg %p144
      // Predicated region
      $region9: #{tpu_custom_call.1} parent=5 // pred_check
        _
      $region10: #{tpu_custom_call.1} parent=5 // pred_check_branch
        %147 = sbr.rel (%p144) target = $region12
      $region11: #{tpu_custom_call.1} parent=5 // pred_region
        %s148 = ssub.s32 %s16, 1
        // Predicated region
        $region13: #{tpu_custom_call.1} parent=11 // pred_check
          %p149 = pneg %p80
        $region14: #{tpu_custom_call.1} parent=11 // pred_check_branch
          %151 = sbr.rel (%p149) target = $region16
        $region15: #{tpu_custom_call.1} parent=11 // pred_region
          %s153 = ssub.s32 512, 512
          %154 = vsyncadd [#allocation6], %s153
          %s155 = smul.addr %s26, 128
          %s156 = scalar_lea.hbm %s1, %s155
          %s157 = sshll.u32 [#allocation5], 4
          %s158 = int_to_ptr.vmem [resolvable:$true] %s157
          %163 = dma.hbm_to_vmem [thread:$0]  %s156, 512, %s158, [#allocation6], 128, 128, 8
        $region16: #{tpu_custom_call.1} parent=11 // pred_fallthru
          _
        // Predicated region
        $region17: #{tpu_custom_call.1} parent=11 // pred_check
          %p164 = pneg %p106
        $region18: #{tpu_custom_call.1} parent=11 // pred_check_branch
          %166 = sbr.rel (%p164) target = $region20
        $region19: #{tpu_custom_call.1} parent=11 // pred_region
          %s168 = ssub.s32 16, 16
          %169 = vsyncadd [#allocation6], %s168
          %s170 = smul.addr %s26, 16
          %s171 = scalar_lea.hbm %s2, %s170
          %s173 = sshll.u32 [#allocation7], 4
          %s174 = int_to_ptr.vmem [resolvable:$true] %s173
          %176 = dma.hbm_to_vmem [thread:$0]  %s171, 16, %s174, [#allocation6]
        $region20: #{tpu_custom_call.1} parent=11 // pred_fallthru
          _
      $region12: #{tpu_custom_call.1} parent=5 // pred_fallthru
        _
      %p177 = scmp.lt.s32.totalorder %s16, 2
      // Predicated region
      $region21: #{tpu_custom_call.1} parent=5 // pred_check
        %p178 = pneg %p177
      $region22: #{tpu_custom_call.1} parent=5 // pred_check_branch
        %180 = sbr.rel (%p178) target = $region24
      $region23: #{tpu_custom_call.1} parent=5 // pred_region
        // Predicated region
        $region25: #{tpu_custom_call.1} parent=23 // pred_check
          %p181 = pneg %p48
        $region26: #{tpu_custom_call.1} parent=23 // pred_check_branch
          %183 = sbr.rel (%p181) target = $region28
        $region27: #{tpu_custom_call.1} parent=23 // pred_region
          %s184 = sand.u32 %s38, 1
          %s185 = scalar_lea.sflag [#allocation3], %s184
          %s186 = sand.u32 %s38, 1
          %s187 = smul.addr %s186, 8
          %s188 = scalar_lea.vmem [#allocation2], %s187
          %s190 = ssub.s32 128, 128
          %191 = vsyncadd %s185, %s190
          %s192 = smul.addr %s23, 128
          %s193 = scalar_lea.hbm %s0, %s192
          %s195 = sshll.u32 %s188, 4
          %s196 = int_to_ptr.vmem [resolvable:$true] %s195
          %198 = dma.hbm_to_vmem [thread:$0]  %s193, 128, %s196, %s185
        $region28: #{tpu_custom_call.1} parent=23 // pred_fallthru
          _
      $region24: #{tpu_custom_call.1} parent=5 // pred_fallthru
        _
      %p199 = scmp.le.s32.totalorder 1, %s16
      %p200 = scmp.lt.s32.totalorder %s16, 3
      %p201 = pnand %p199, %p200
      %p202 = pneg %p201
      // Predicated region
      $region29: #{tpu_custom_call.1} parent=5 // pred_check
        _
      $region30: #{tpu_custom_call.1} parent=5 // pred_check_branch
        %204 = sbr.rel (%p201) target = $region32
      $region31: #{tpu_custom_call.1} parent=5 // pred_region
        %s205 = ssub.s32 %s16, 1
        %s206 = sand.u32 %s41, 1
        %s207 = scalar_lea.sflag [#allocation3], %s206
        %s208 = sand.u32 %s41, 1
        %s209 = smul.addr %s208, 8
        %s210 = scalar_lea.vmem [#allocation2], %s209
        // Predicated region
        $region33: #{tpu_custom_call.1} parent=31 // pred_check
          %p211 = pneg %p54
        $region34: #{tpu_custom_call.1} parent=31 // pred_check_branch
          %213 = sbr.rel (%p211) target = $region36
        $region35: #{tpu_custom_call.1} parent=31 // pred_region
          %214 = dma.done %s207, 128
        $region36: #{tpu_custom_call.1} parent=31 // pred_fallthru
          _
        // Predicated region
        $region37: #{tpu_custom_call.1} parent=31 // pred_check
          %p215 = pneg %p80
        $region38: #{tpu_custom_call.1} parent=31 // pred_check_branch
          %217 = sbr.rel (%p215) target = $region40
        $region39: #{tpu_custom_call.1} parent=31 // pred_region
          %218 = dma.done [#allocation6], 512
        $region40: #{tpu_custom_call.1} parent=31 // pred_fallthru
          _
        // Predicated region
        $region41: #{tpu_custom_call.1} parent=31 // pred_check
          %p219 = pneg %p106
        $region42: #{tpu_custom_call.1} parent=31 // pred_check_branch
          %221 = sbr.rel (%p219) target = $region44
        $region43: #{tpu_custom_call.1} parent=31 // pred_region
          %222 = dma.done [#allocation6], 16
        $region44: #{tpu_custom_call.1} parent=31 // pred_fallthru
          _
        %s223 = sand.u32 %s41, 1
        %s224 = scalar_lea.sflag [#allocation3], %s223
        %s225 = sand.u32 %s41, 1
        %s226 = smul.addr %s225, 8
        %s227 = scalar_lea.vmem [#allocation2], %s226
        %p228 = pneg %p54
        %p229 = pneg %p51
        %p230 = pneg %p80
        %p231 = pneg %p77
        %p232 = pneg %p106
        %p233 = pneg %p103
        %p234 = pneg %p134
        %p235 = pneg %p131
        %s236 = sand.u32 %s121, 1
        %s237 = scalar_lea.sflag [#allocation4], %s236
        %s238 = sand.u32 %s121, 1
        %s239 = smul.addr %s238, 8
        %s240 = scalar_lea.vmem [#allocation8], %s239
        %v241 = vld [vmem:[%s210] sm:$0xff]
        %v242 = vld [vmem:[#allocation5] sm:$0xff]
        %v243 = vld [vmem:[#allocation5 + $0x8] sm:$0xff]
        %v244 = vld [vmem:[#allocation5 + $0x10] sm:$0xff]
        %v245 = vld [vmem:[#allocation5 + $0x18] sm:$0xff]
        %v246 = vld [vmem:[#allocation7] sm:$0x1]
        %v248 = vlaneseq
        %v249 = vshrl.u32 %v248, 7
        %v250 = vsub.s32 0, %v249
        %v251 = vrot.slane %v246, %v250
        %vm253 = vcmask 261120
        %v255 = vsel %vm253, %v241, 0
        %257 = vmatprep.subr.mxu0 0.0
        %258 = vmatpush1.msra.mxu0 %v242
        %259 = vmatprep.subr.mxu0 0.0
        %260 = vmatpush1.msra.mxu0 %v243
        %261 = vmatprep.subr.mxu0 0.0
        %262 = vmatpush1.msra.mxu0 %v244
        %263 = vmatprep.subr.mxu0 0.0
        %264 = vmatpush1.msra.mxu0 %v245
        %265 = vmatprep.subr.mxu0 0.0
        %266 = vmatpush1.msra.mxu0 0.0
        %267 = vmatprep.subr.mxu0 0.0
        %268 = vmatpush1.msra.mxu0 0.0
        %269 = vmatprep.subr.mxu0 0.0
        %270 = vmatpush1.msra.mxu0 0.0
        %271 = vmatprep.subr.mxu0 0.0
        %272 = vmatpush1.msra.mxu0 0.0
        %273 = vmatprep.subr.mxu0 0.0
        %274 = vmatpush1.msra.mxu0 0.0
        %275 = vmatprep.subr.mxu0 0.0
        %276 = vmatpush1.msra.mxu0 0.0
        %277 = vmatprep.subr.mxu0 0.0
        %278 = vmatpush1.msra.mxu0 0.0
        %279 = vmatprep.subr.mxu0 0.0
        %280 = vmatpush1.msra.mxu0 0.0
        %281 = vmatprep.subr.mxu0 0.0
        %282 = vmatpush1.msra.mxu0 0.0
        %283 = vmatprep.subr.mxu0 0.0
        %284 = vmatpush1.msra.mxu0 0.0
        %285 = vmatprep.subr.mxu0 0.0
        %286 = vmatpush1.msra.mxu0 0.0
        %287 = vmatprep.subr.mxu0 0.0
        %288 = vmatpush1.msra.mxu0 0.0
        %289 = vmatprep.subr.mxu0 0.0
        %290 = vmatpush1.msra.mxu0 0.0
        %291 = vmatprep.subr.mxu0 0.0
        %292 = vmatpush1.msra.mxu0 0.0
        %293 = vmatprep.subr.mxu0 0.0
        %294 = vmatpush1.msra.mxu0 0.0
        %295 = vmatprep.subr.mxu0 0.0
        %296 = vmatpush1.msra.mxu0 0.0
        %297 = vmatprep.subr.mxu0 0.0
        %298 = vmatpush1.msra.mxu0 0.0
        %299 = vmatprep.subr.mxu0 0.0
        %300 = vmatpush1.msra.mxu0 0.0
        %301 = vmatprep.subr.mxu0 0.0
        %302 = vmatpush1.msra.mxu0 0.0
        %303 = vmatprep.subr.mxu0 0.0
        %304 = vmatpush1.msra.mxu0 0.0
        %305 = vmatprep.subr.mxu0 0.0
        %306 = vmatpush1.msra.mxu0 0.0
        %307 = vmatprep.subr.mxu0 0.0
        %308 = vmatpush1.msra.mxu0 0.0
        %309 = vmatprep.subr.mxu0 0.0
        %310 = vmatpush1.msra.mxu0 0.0
        %311 = vmatprep.subr.mxu0 0.0
        %312 = vmatpush1.msra.mxu0 0.0
        %313 = vmatprep.subr.mxu0 0.0
        %314 = vmatpush1.msra.mxu0 0.0
        %315 = vmatprep.subr.mxu0 0.0
        %316 = vmatpush1.msra.mxu0 0.0
        %317 = vmatprep.subr.mxu0 0.0
        %318 = vmatpush1.msra.mxu0 0.0
        %319 = vmatprep.subr.mxu0 0.0
        %320 = vmatpush1.msra.mxu0 0.0
        %321 = vmatprep.mubr.f32.mxu0 0.0
        %322 = vmatmul.mubr.f32.gmra.mrb[0].mxu0 %v255
        %v323 = vpop.f32.mrb[0].mxu0
        %v324 = vadd.f32 %v251, %v323
        %v325 = vpop.f32.mrb[0].mxu0
        %326 = vdwg.mxu0
        %vm327 = vcmask 130048
        %328 = vst.msk [vmem:[%s240] sm:$0xff] %vm327, %v324
        %s329 = sand.u32 %s121, 1
        %s330 = scalar_lea.sflag [#allocation4], %s329
        %s331 = sand.u32 %s121, 1
        %s332 = smul.addr %s331, 8
        %s333 = scalar_lea.vmem [#allocation8], %s332
        // Predicated region
        $region45: #{tpu_custom_call.1} parent=31 // pred_check
          %p334 = pneg %p131
        $region46: #{tpu_custom_call.1} parent=31 // pred_check_branch
          %336 = sbr.rel (%p334) target = $region48
        $region47: #{tpu_custom_call.1} parent=31 // pred_region
          %s338 = ssub.s32 128, 128
          %339 = vsyncadd %s330, %s338
          %s340 = sadd.s32 %s26, %s25
          %s341 = smul.addr %s340, 128
          %s342 = scalar_lea.hbm %s3, %s341
          %s344 = sshll.u32 %s333, 4
          %s345 = int_to_ptr.vmem [resolvable:$true] %s344
          %347 = dma.vmem_to_hbm [thread:$0]  %s345, 128, %s342, %s330
        $region48: #{tpu_custom_call.1} parent=31 // pred_fallthru
          _
      $region32: #{tpu_custom_call.1} parent=5 // pred_fallthru
        _
      %p348 = scmp.le.s32.totalorder 2, %s16
      // Predicated region
      $region49: #{tpu_custom_call.1} parent=5 // pred_check
        %p349 = pneg %p348
      $region50: #{tpu_custom_call.1} parent=5 // pred_check_branch
        %351 = sbr.rel (%p349) target = $region52
      $region51: #{tpu_custom_call.1} parent=5 // pred_region
        %s352 = ssub.s32 %s16, 2
        // Predicated region
        $region53: #{tpu_custom_call.1} parent=51 // pred_check
          %p353 = pneg %p137
        $region54: #{tpu_custom_call.1} parent=51 // pred_check_branch
          %355 = sbr.rel (%p353) target = $region56
        $region55: #{tpu_custom_call.1} parent=51 // pred_region
          %s356 = sand.u32 %s122, 1
          %s357 = scalar_lea.sflag [#allocation4], %s356
          %s358 = sand.u32 %s122, 1
          %s359 = smul.addr %s358, 8
          %s360 = scalar_lea.vmem [#allocation8], %s359
          %361 = dma.done %s357, 128
        $region56: #{tpu_custom_call.1} parent=51 // pred_fallthru
          _
      $region52: #{tpu_custom_call.1} parent=5 // pred_fallthru
        _
    $region6: #{tpu_custom_call.1} parent=1 // loop_footer
      %s20 = sadd.s32 1, %s16
    $region7: #{tpu_custom_call.1} parent=1 // loop_footer_branch
      %15 = sbr.rel target = $region3
    $region8: #{tpu_custom_call.1} parent=1 // loop_exit
      _
    %362 = vsyncpa [#allocation3], 1
    %s363 = scalar_lea.sflag [#allocation3], 1
    %364 = vsyncpa %s363, 1
    %365 = vsyncpa [#allocation6], 1
    %366 = vsyncpa [#allocation4], 1
    %s367 = scalar_lea.sflag [#allocation4], 1
    %368 = vsyncpa %s367, 1

</llo_original>
